<compile_context>
chip_gen: v7x
topology: tpu7x:2x2x1
jax: 0.10.0
libtpu: 0.0.40
codegen_flags: <defaults>
</compile_context>

<pallas_src>
import functools
import math

import jax
import jax.numpy as jnp
from jax.experimental import pallas as pl
from jax.experimental.pallas import tpu as pltpu


GROUPS = 32
WIDTH_PER_GROUP = 8
EXPANSION = 4
LANE = 128
TILE_M = 256
VMEM_LIMIT_BYTES = 32 * 1024 * 1024
LAYER_SPECS = [(64, 3, 1), (128, 4, 2), (256, 23, 2), (512, 3, 2)]


def _round_up(x, m):
    return (x + m - 1) // m * m


def _pick_tm(m, cap=TILE_M):
    if m <= cap:
        return m, m
    return cap, _round_up(m, cap)


# ---------------------------------------------------------------------------
# Dense GEMM (+ folded BN + optional residual + optional ReLU), M/N/K tiled
# ---------------------------------------------------------------------------
def _dense_body(a_ref, b_ref, s_ref, c_ref, o_ref, acc_ref, *, relu):
    @pl.when(pl.program_id(2) == 0)
    def _init():
        acc_ref[...] = jnp.zeros_like(acc_ref)

    acc_ref[...] += jnp.dot(a_ref[...], b_ref[...],
                            preferred_element_type=jnp.float32)

    @pl.when(pl.program_id(2) == pl.num_programs(2) - 1)
    def _epilogue():
        y = acc_ref[...] * s_ref[...] + c_ref[...]
        if relu:
            y = jnp.maximum(y, 0.0)
        o_ref[...] = y.astype(o_ref.dtype)


def _dense_res_body(a_ref, b_ref, s_ref, c_ref, r_ref, o_ref, acc_ref, *, relu):
    @pl.when(pl.program_id(2) == 0)
    def _init():
        acc_ref[...] = jnp.zeros_like(acc_ref)

    acc_ref[...] += jnp.dot(a_ref[...], b_ref[...],
                            preferred_element_type=jnp.float32)

    @pl.when(pl.program_id(2) == pl.num_programs(2) - 1)
    def _epilogue():
        y = acc_ref[...] * s_ref[...] + c_ref[...] + r_ref[...].astype(jnp.float32)
        if relu:
            y = jnp.maximum(y, 0.0)
        o_ref[...] = y.astype(o_ref.dtype)


@functools.lru_cache(maxsize=None)
def _get_dense_gemm(mp, kp, n, tm, tk, tn, relu, residual):
    body = functools.partial(_dense_res_body if residual else _dense_body, relu=relu)
    in_specs = [
        pl.BlockSpec((tm, tk), lambda i, j, k: (i, k)),   # activations
        pl.BlockSpec((tk, tn), lambda i, j, k: (k, j)),   # weights
        pl.BlockSpec((1, tn), lambda i, j, k: (0, j)),    # BN scale
        pl.BlockSpec((1, tn), lambda i, j, k: (0, j)),    # BN shift
    ]
    if residual:
        in_specs.append(pl.BlockSpec((tm, tn), lambda i, j, k: (i, j)))
    call = pl.pallas_call(
        body,
        out_shape=jax.ShapeDtypeStruct((mp, n), jnp.bfloat16),
        grid=(mp // tm, n // tn, kp // tk),
        in_specs=in_specs,
        out_specs=pl.BlockSpec((tm, tn), lambda i, j, k: (i, j)),
        scratch_shapes=[pltpu.VMEM((tm, tn), jnp.float32)],
        compiler_params=pltpu.CompilerParams(
            dimension_semantics=("parallel", "parallel", "arbitrary"),
            vmem_limit_bytes=VMEM_LIMIT_BYTES),
    )
    return jax.jit(call)


def dense_gemm(a, w, scale, shift, *, relu, residual=None):
    """A(M,K) @ W(K,N) * scale + shift [+ residual] [ReLU] -> bf16 (M,N)."""
    m, k = a.shape
    n_out = w.shape[1]
    tm, mp = _pick_tm(m)
    if mp != m:
        a = jnp.pad(a, ((0, mp - m), (0, 0)))
        if residual is not None:
            residual = jnp.pad(residual, ((0, mp - m), (0, 0)))
    if k <= 1536:
        tk, kp = k, k
    else:
        tk = 512
        kp = _round_up(k, tk)
        if kp != k:
            a = jnp.pad(a, ((0, 0), (0, kp - k)))
            w = jnp.pad(w, ((0, kp - k), (0, 0)))
    tn = n_out
    for cand in (256, 128):
        if n_out % cand == 0:
            tn = cand
            break
    fn = _get_dense_gemm(mp, kp, n_out, tm, tk, tn, relu, residual is not None)
    args = (a, w, scale, shift) + ((residual,) if residual is not None else ())
    out = fn(*args)
    return out[:m] if mp != m else out


# ---------------------------------------------------------------------------
# Grouped 3x3 conv (lane-dense super-groups, per-tap MXU accumulation) + BN + ReLU
# ---------------------------------------------------------------------------
def _grouped_body(a_ref, b_ref, s_ref, c_ref, o_ref, *, taps):
    acc = jnp.dot(a_ref[0], b_ref[0, 0], preferred_element_type=jnp.float32)
    for t in range(1, taps):
        acc = acc + jnp.dot(a_ref[t], b_ref[0, t],
                            preferred_element_type=jnp.float32)
    y = acc * s_ref[...] + c_ref[...]
    o_ref[...] = jnp.maximum(y, 0.0).astype(o_ref.dtype)


@functools.lru_cache(maxsize=None)
def _get_grouped_conv(gs, mp, pcg, tm, taps):
    body = functools.partial(_grouped_body, taps=taps)
    call = pl.pallas_call(
        body,
        out_shape=jax.ShapeDtypeStruct((mp, gs * pcg), jnp.bfloat16),
        grid=(gs, mp // tm),                               # g outer: weights DMA'd once per g
        in_specs=[
            pl.BlockSpec((taps, tm, pcg), lambda g, i: (0, i, g)),      # patches slice
            pl.BlockSpec((1, taps, pcg, pcg), lambda g, i: (g, 0, 0, 0)),  # packed weights
            pl.BlockSpec((1, pcg), lambda g, i: (0, g)),                # BN scale
            pl.BlockSpec((1, pcg), lambda g, i: (0, g)),                # BN shift
        ],
        out_specs=pl.BlockSpec((tm, pcg), lambda g, i: (i, g)),          # lane-dense store
        compiler_params=pltpu.CompilerParams(
            dimension_semantics=("parallel", "parallel"),
            vmem_limit_bytes=VMEM_LIMIT_BYTES),
    )
    return jax.jit(call)


def grouped_conv3x3(x, w_packed, scale, shift, *, stride):
    n, h, w, width = x.shape
    gs, taps, pcg, _ = w_packed.shape
    patches, oh, ow = _patches_tap_first(x, 3, 3, stride, 1)
    m = n * oh * ow
    tm, mp = _pick_tm(m)
    if mp != m:
        patches = jnp.pad(patches, ((0, 0), (0, mp - m), (0, 0)))
    out = _get_grouped_conv(gs, mp, pcg, tm, taps)(patches, w_packed, scale, shift)
    if mp != m:
        out = out[:m]
    return out.reshape(n, oh, ow, width)


# ---------------------------------------------------------------------------
# Maxpool 3x3/s2 (tiled over rows) and fused avgpool + fc + L2-normalize head
# ---------------------------------------------------------------------------
@functools.lru_cache(maxsize=None)
def _get_maxpool(mp, c, tm, taps):
    def body(x_ref, o_ref):
        acc = x_ref[0]
        for t in range(1, taps):
            acc = jnp.maximum(acc, x_ref[t])
        o_ref[...] = acc

    call = pl.pallas_call(
        body,
        out_shape=jax.ShapeDtypeStruct((mp, c), jnp.bfloat16),
        grid=(mp // tm,),
        in_specs=[pl.BlockSpec((taps, tm, c), lambda i: (0, i, 0))],
        out_specs=pl.BlockSpec((tm, c), lambda i: (i, 0)),
        compiler_params=pltpu.CompilerParams(
            dimension_semantics=("parallel",),
            vmem_limit_bytes=VMEM_LIMIT_BYTES),
    )
    return jax.jit(call)


def maxpool_3x3_s2(x):
    n, h, w, c = x.shape
    patches, oh, ow = _patches_tap_first(x, 3, 3, 2, 1, pad_value=-jnp.inf)
    m = n * oh * ow
    tm, mp = _pick_tm(m)
    if mp != m:
        patches = jnp.pad(patches, ((0, 0), (0, mp - m), (0, 0)))
    out = _get_maxpool(mp, c, tm, 9)(patches)
    if mp != m:
        out = out[:m]
    return out.reshape(n, oh, ow, c)


def _head_body(x_ref, w_ref, b_ref, avg_ref, z_ref, *, inv_hw, normalize):
    pooled = jnp.sum(x_ref[...].astype(jnp.float32), axis=1) * inv_hw    # (tb, C)
    avg_ref[...] = pooled
    z = jnp.dot(pooled, w_ref[...], preferred_element_type=jnp.float32) + b_ref[...]
    if normalize:
        nrm = jnp.sqrt(jnp.sum(z * z, axis=-1, keepdims=True))
        z = z / jnp.maximum(nrm, 1e-12)                                  # F.normalize
    z_ref[...] = z


@functools.lru_cache(maxsize=None)
def _get_head(bp, hw, c, e, tb, normalize):
    body = functools.partial(_head_body, inv_hw=1.0 / hw, normalize=normalize)
    call = pl.pallas_call(
        body,
        out_shape=(jax.ShapeDtypeStruct((bp, c), jnp.float32),
                   jax.ShapeDtypeStruct((bp, e), jnp.float32)),
        grid=(bp // tb,),
        in_specs=[
            pl.BlockSpec((tb, hw, c), lambda i: (i, 0, 0)),
            pl.BlockSpec((c, e), lambda i: (0, 0)),
            pl.BlockSpec((1, e), lambda i: (0, 0)),
        ],
        out_specs=(pl.BlockSpec((tb, c), lambda i: (i, 0)),
                   pl.BlockSpec((tb, e), lambda i: (i, 0))),
        compiler_params=pltpu.CompilerParams(
            dimension_semantics=("parallel",),
            vmem_limit_bytes=VMEM_LIMIT_BYTES),
    )
    return jax.jit(call)


def pooled_fc_head(x, fc_w, fc_b, *, normalize):
    n, h, w, c = x.shape
    hw = h * w
    xr = x.reshape(n, hw, c)
    tb = n if n <= 8 else 8
    bp = _round_up(n, tb)
    if bp != n:
        xr = jnp.pad(xr, ((0, bp - n), (0, 0), (0, 0)))
    e = fc_w.shape[1]
    avg, z = _get_head(bp, hw, c, e, tb, normalize)(xr, fc_w, fc_b)
    if bp != n:
        avg, z = avg[:n], z[:n]
    return avg, z


# ---------------------------------------------------------------------------
# Glue: patch extraction
# TODO(synk): patches are still materialized in HBM (kh*kw activation copies);
# a fully-fused conv reading the padded input per tap via Element-offset
# index_maps would remove this blow-up.
# ---------------------------------------------------------------------------
def _patches_tap_first(x, kh, kw, stride, pad, pad_value=0.0):
    n, h, w, c = x.shape
    xp = jnp.pad(x, ((0, 0), (pad, pad), (pad, pad), (0, 0)),
                 constant_values=pad_value) if pad else x
    hp, wp = h + 2 * pad, w + 2 * pad
    oh = (hp - kh) // stride + 1
    ow = (wp - kw) // stride + 1
    cols = [xp[:, i:i + stride * oh:stride, j:j + stride * ow:stride, :]
            for i in range(kh) for j in range(kw)]
    pt = jnp.stack(cols, axis=0)                       # (taps, N, OH, OW, C)
    return pt.reshape(kh * kw, n * oh * ow, c), oh, ow


def _patches_tap_last(x, kh, kw, stride, pad, pad_value=0.0):
    n, h, w, c = x.shape
    xp = jnp.pad(x, ((0, 0), (pad, pad), (pad, pad), (0, 0)),
                 constant_values=pad_value) if pad else x
    hp, wp = h + 2 * pad, w + 2 * pad
    oh = (hp - kh) // stride + 1
    ow = (wp - kw) // stride + 1
    cols = [xp[:, i:i + stride * oh:stride, j:j + stride * ow:stride, :]
            for i in range(kh) for j in range(kw)]
    pt = jnp.stack(cols, axis=3)                       # (N, OH, OW, taps, C)
    return pt.reshape(n * oh * ow, kh * kw * c), oh, ow


# ---------------------------------------------------------------------------
# Parameters (deterministic synthetic init)
# TODO(synk): `pretrained=True` ImageNet checkpoint loading has no in-script
# equivalent; weights are deterministic He-style random tensors.
# ---------------------------------------------------------------------------
class _KeyGen:
    def __init__(self, key):
        self._key = key

    def __call__(self):
        self._key, sub = jax.random.split(self._key)
        return sub


def _he(kg, k, n):
    w = jax.random.normal(kg(), (k, n), jnp.float32) * math.sqrt(2.0 / k)
    return w.astype(jnp.bfloat16)


def _bn_fold(c, eps=1e-5):
    # frozen / eval BatchNorm: gamma=1, beta=0, running_mean=0, running_var=1
    gamma = jnp.ones((1, c), jnp.float32)
    beta = jnp.zeros((1, c), jnp.float32)
    mean = jnp.zeros((1, c), jnp.float32)
    var = jnp.ones((1, c), jnp.float32)
    scale = gamma * jax.lax.rsqrt(var + eps)
    shift = beta - mean * scale
    return scale, shift


def _pack_grouped_block_diag(w, pack):
    """(G, taps, cg, cg) per-group weights -> (G/pack, taps, pack*cg, pack*cg)
    block-diagonal 'super-group' weights (lane-dense output columns)."""
    g, taps, cg, _ = w.shape
    gs = g // pack
    pcg = pack * cg
    wr = w.reshape(gs, pack, taps, cg, cg)
    out = jnp.zeros((gs, taps, pcg, pcg), w.dtype)
    for p in range(pack):
        out = out.at[:, :, p * cg:(p + 1) * cg, p * cg:(p + 1) * cg].set(wr[:, p])
    return out


def _make_bottleneck(kg, inplanes, planes, stride):
    width = int(planes * (WIDTH_PER_GROUP / 64.0)) * GROUPS
    out_ch = planes * EXPANSION
    cg = width // GROUPS
    pack = max(1, LANE // cg)
    while GROUPS % pack:
        pack //= 2
    p = {"stride": stride}
    p["w1"] = _he(kg, inplanes, width)                       # 1x1
    p["s1"], p["b1"] = _bn_fold(width)
    w2 = (jax.random.normal(kg(), (GROUPS, 9, cg, cg), jnp.float32)
          * math.sqrt(2.0 / (9 * cg))).astype(jnp.bfloat16)  # 3x3 grouped
    p["w2"] = _pack_grouped_block_diag(w2, pack)
    p["s2"], p["b2"] = _bn_fold(width)
    p["w3"] = _he(kg, width, out_ch)                         # 1x1
    p["s3"], p["b3"] = _bn_fold(out_ch)
    if stride != 1 or inplanes != out_ch:
        p["dw"] = _he(kg, inplanes, out_ch)                  # downsample 1x1 (strided)
        p["ds"], p["db"] = _bn_fold(out_ch)
    else:
        p["dw"] = None
    return p, out_ch


def init_params(key, embed_dim):
    kg = _KeyGen(key)
    params = {"stem_w": _he(kg, 7 * 7 * 3, 64)}
    params["stem_s"], params["stem_b"] = _bn_fold(64)
    inplanes = 64
    layers = []
    for planes, n_blocks, stride in LAYER_SPECS:
        layer = []
        for bi in range(n_blocks):
            bp, inplanes = _make_bottleneck(kg, inplanes, planes,
                                            stride if bi == 0 else 1)
            layer.append(bp)
        layers.append(layer)
    params["layers"] = layers
    # `model.fc` replaced by Linear(2048, embed_dim); kept f32 for the head.
    params["fc_w"] = (jax.random.normal(kg(), (inplanes, embed_dim), jnp.float32)
                      / math.sqrt(inplanes))
    params["fc_b"] = jnp.zeros((1, embed_dim), jnp.float32)
    return params


# ---------------------------------------------------------------------------
# Forward pass (matches Network.forward)
# ---------------------------------------------------------------------------
def _bottleneck_forward(x, p):
    n, h, w, cin = x.shape
    stride = p["stride"]
    a = x.reshape(n * h * w, cin)
    width = p["w1"].shape[1]

    out1 = dense_gemm(a, p["w1"], p["s1"], p["b1"], relu=True)
    out2 = grouped_conv3x3(out1.reshape(n, h, w, width), p["w2"], p["s2"], p["b2"],
                           stride=stride)
    n2, oh, ow, _ = out2.shape
    m2 = n2 * oh * ow
    a2 = out2.reshape(m2, width)

    if p["dw"] is not None:
        xs = x if stride == 1 else x[:, ::stride, ::stride, :]
        identity = dense_gemm(xs.reshape(m2, cin), p["dw"], p["ds"], p["db"],
                              relu=False)
    else:
        identity = a
    # out = relu(bn3(conv3(out)) + identity) -- fused in one Pallas GEMM epilogue
    out3 = dense_gemm(a2, p["w3"], p["s3"], p["b3"], relu=True, residual=identity)
    return out3.reshape(n2, oh, ow, -1)


def network_forward(x_nchw, params, arch="resnext101_frozen_normalize", warmup=False):
    # TODO(synk): the module's IPython embed() debug hook and the warmup/.detach()
    # branch have no kernel equivalent (detach is a no-op for inference).
    x = jnp.transpose(x_nchw, (0, 2, 3, 1)).astype(jnp.bfloat16)      # NCHW -> NHWC
    n = x.shape[0]

    patches, oh, ow = _patches_tap_last(x, 7, 7, 2, 3)                # stem 7x7/s2
    x = dense_gemm(patches, params["stem_w"], params["stem_s"], params["stem_b"],
                   relu=True).reshape(n, oh, ow, -1)
    x = maxpool_3x3_s2(x)

    for layer in params["layers"]:
        for block in layer:
            x = _bottleneck_forward(x, block)

    prepool = x                                                        # (N, H, W, 2048)
    avg, z = pooled_fc_head(prepool, params["fc_w"], params["fc_b"],
                            normalize=("normalize" in arch))           # pool_base only
    features = jnp.transpose(prepool, (0, 3, 1, 2)).astype(jnp.float32)  # back to NCHW
    return {
        "embeds": z,
        "avg_features": avg,
        "features": features,
        "extra_embeds": features,
    }


# ---------------------------------------------------------------------------
if __name__ == "__main__":
    EMBED_DIM = 128
    key = jax.random.PRNGKey(0)
    k_in, k_par = jax.random.split(key)
    x = jax.random.normal(k_in, (2, 3, 16, 16), jnp.float32)  # NCHW, like PyTorch
    params = init_params(k_par, EMBED_DIM)

    out = network_forward(x, params, arch="resnext101_frozen_normalize")
    out = jax.block_until_ready(out)

    assert out["embeds"].shape == (2, EMBED_DIM)
    assert out["avg_features"].shape == (2, 2048)
    assert out["features"].shape == (2, 2048, 1, 1)
    assert out["extra_embeds"].shape == (2, 2048, 1, 1)
    assert bool(jnp.all(jnp.isfinite(out["embeds"])))
    print("KERNEL_OK")
</pallas_src>

<mosaic_0001>
module attributes {stable_mosaic.version = 11 : i64} {
  func.func @_dense_body(%arg0: i32, %arg1: i32, %arg2: i32, %arg3: memref<128x147xbf16, #tpu.memory_space<vmem>>, %arg4: memref<147x64xbf16, #tpu.memory_space<vmem>>, %arg5: memref<1x64xf32, #tpu.memory_space<vmem>>, %arg6: memref<1x64xf32, #tpu.memory_space<vmem>>, %arg7: memref<128x64xbf16, #tpu.memory_space<vmem>>, %arg8: memref<128x64xf32, #tpu.memory_space<vmem>>) attributes {dimension_semantics = [#tpu.dimension_semantics<parallel>, #tpu.dimension_semantics<parallel>, #tpu.dimension_semantics<arbitrary>], iteration_bounds = array<i64: 1, 1, 1>, scalar_prefetch = 0 : i64, scratch_operands = 1 : i64, tpu.core_type = #tpu.core_type<tc>, window_params = [{transform_indices = @transform_0, window_bounds = array<i64: 128, 147>}, {transform_indices = @transform_1, window_bounds = array<i64: 147, 64>}, {transform_indices = @transform_2, window_bounds = array<i64: 1, 64>}, {transform_indices = @transform_3, window_bounds = array<i64: 1, 64>}, {transform_indices = @transform_4, window_bounds = array<i64: 128, 64>}]} {
    %c0_i32 = arith.constant 0 : i32
    %0 = arith.cmpi eq, %arg2, %c0_i32 : i32
    %1 = arith.extui %0 : i1 to i32
    %c0_i32_0 = arith.constant 0 : i32
    %2 = arith.cmpi ne, %1, %c0_i32_0 : i32
    scf.if %2 {
      %cst_10 = arith.constant 0.000000e+00 : f32
      %12 = vector.broadcast %cst_10 : f32 to vector<128x64xf32>
      %c0_11 = arith.constant 0 : index
      %c0_12 = arith.constant 0 : index
      %13 = vector.load %arg8[%c0_11, %c0_12] : memref<128x64xf32, #tpu.memory_space<vmem>>, vector<128x64xf32>
      tpu.vector_store %arg8[%c0_11, %c0_12], %12 {strides = array<i32>} : memref<128x64xf32, #tpu.memory_space<vmem>>, vector<128x64xf32>,
    } else {
    }
    %c0 = arith.constant 0 : index
    %c0_1 = arith.constant 0 : index
    %3 = vector.load %arg8[%c0, %c0_1] : memref<128x64xf32, #tpu.memory_space<vmem>>, vector<128x64xf32>
    %c0_2 = arith.constant 0 : index
    %c0_3 = arith.constant 0 : index
    %4 = vector.load %arg3[%c0_2, %c0_3] : memref<128x147xbf16, #tpu.memory_space<vmem>>, vector<128x147xbf16>
    %c0_4 = arith.constant 0 : index
    %c0_5 = arith.constant 0 : index
    %5 = vector.load %arg4[%c0_4, %c0_5] : memref<147x64xbf16, #tpu.memory_space<vmem>>, vector<147x64xbf16>
    %cst = arith.constant dense<0.000000e+00> : vector<128x64xf32>
    %6 = tpu.matmul %4, %5, %cst {dimension_numbers = #tpu.dot_dimension_numbers<[1], [0], [0], [1], [0, 0, 1, 1], [], []>} : vector<128x147xbf16>, vector<147x64xbf16>, vector<128x64xf32> -> vector<128x64xf32>
    %7 = arith.addf %3, %6 : vector<128x64xf32>
    %c0_6 = arith.constant 0 : index
    %c0_7 = arith.constant 0 : index
    %8 = vector.load %arg8[%c0_6, %c0_7] : memref<128x64xf32, #tpu.memory_space<vmem>>, vector<128x64xf32>
    tpu.vector_store %arg8[%c0_6, %c0_7], %7 {strides = array<i32>} : memref<128x64xf32, #tpu.memory_space<vmem>>, vector<128x64xf32>,
    %c0_i32_8 = arith.constant 0 : i32
    %9 = arith.cmpi eq, %arg2, %c0_i32_8 : i32
    %10 = arith.extui %9 : i1 to i32
    %c0_i32_9 = arith.constant 0 : i32
    %11 = arith.cmpi ne, %10, %c0_i32_9 : i32
    scf.if %11 {
      %c0_10 = arith.constant 0 : index
      %c0_11 = arith.constant 0 : index
      %12 = vector.load %arg8[%c0_10, %c0_11] : memref<128x64xf32, #tpu.memory_space<vmem>>, vector<128x64xf32>
      %c0_12 = arith.constant 0 : index
      %c0_13 = arith.constant 0 : index
      %13 = vector.load %arg5[%c0_12, %c0_13] : memref<1x64xf32, #tpu.memory_space<vmem>>, vector<1x64xf32>
      %14 = vector.broadcast %13 : vector<1x64xf32> to vector<128x64xf32>
      %15 = arith.mulf %12, %14 : vector<128x64xf32>
      %c0_14 = arith.constant 0 : index
      %c0_15 = arith.constant 0 : index
      %16 = vector.load %arg6[%c0_14, %c0_15] : memref<1x64xf32, #tpu.memory_space<vmem>>, vector<1x64xf32>
      %17 = vector.broadcast %16 : vector<1x64xf32> to vector<128x64xf32>
      %18 = arith.addf %15, %17 : vector<128x64xf32>
      %cst_16 = arith.constant 0.000000e+00 : f32
      %19 = vector.broadcast %cst_16 : f32 to vector<128x64xf32>
      %20 = arith.maximumf %18, %19 : vector<128x64xf32>
      %21 = arith.truncf %20 : vector<128x64xf32> to vector<128x64xbf16>
      %c0_17 = arith.constant 0 : index
      %c0_18 = arith.constant 0 : index
      %22 = vector.load %arg7[%c0_17, %c0_18] : memref<128x64xbf16, #tpu.memory_space<vmem>>, vector<128x64xbf16>
      tpu.vector_store %arg7[%c0_17, %c0_18], %21 {strides = array<i32>} : memref<128x64xbf16, #tpu.memory_space<vmem>>, vector<128x64xbf16>,
    } else {
    }
    return
  }
  func.func @transform_0(%arg0: i32, %arg1: i32, %arg2: i32) -> (i32, i32) {
    %c0_i32 = arith.constant 0 : i32
    return %arg0, %arg2 : i32, i32
  }
  func.func @transform_1(%arg0: i32, %arg1: i32, %arg2: i32) -> (i32, i32) {
    %c0_i32 = arith.constant 0 : i32
    return %arg2, %arg1 : i32, i32
  }
  func.func @transform_2(%arg0: i32, %arg1: i32, %arg2: i32) -> (i32, i32) {
    %c0_i32 = arith.constant 0 : i32
    %c0_i32_0 = arith.constant 0 : i32
    return %c0_i32, %arg1 : i32, i32
  }
  func.func @transform_3(%arg0: i32, %arg1: i32, %arg2: i32) -> (i32, i32) {
    %c0_i32 = arith.constant 0 : i32
    %c0_i32_0 = arith.constant 0 : i32
    return %c0_i32, %arg1 : i32, i32
  }
  func.func @transform_4(%arg0: i32, %arg1: i32, %arg2: i32) -> (i32, i32) {
    %c0_i32 = arith.constant 0 : i32
    return %arg0, %arg1 : i32, i32
  }
}

</mosaic_0001>

<llo_original>
// kernel: tpu_custom_call.1
$region0: #{tpu_custom_call.1}
  #allocation0 [shape = 'u32[]', space=smem, size = 0x4, offset = 0x4, fixed_abs, tag = 'smem constant byte address 0x4 - core index']
  #allocation1 [shape = 'u32[144,128]{1,0:T(1,128)}', space=vmem, size = 0x12000, scoped, tag = 'internal scratch']
  #allocation2 [shape = 'f32[128,64]{1,0:T(8,128)}', space=vmem, size = 0x10000, scoped, tag = 'scratch operand']
  %s0 = inlined_call_operand.vmem [shape: bf16[128,147], index: 0, kind: input, shape index: {}]
  %s1 = inlined_call_operand.vmem [shape: bf16[147,64], index: 1, kind: input, shape index: {}]
  %s2 = inlined_call_operand.vmem [shape: f32[1,64], index: 2, kind: input, shape index: {}]
  %s3 = inlined_call_operand.vmem [shape: f32[1,64], index: 3, kind: input, shape index: {}]
  %s4 = inlined_call_operand.vmem [shape: bf16[128,64], index: 4, kind: output, shape index: {}]
  %s5 = sld [smem:[#allocation0]]
  $region34: #{tpu_custom_call.1} parent=0
    _
  %s7 = ssub.s32 1, %s5
  %s8 = scalar_select 0, %s7, %s5
  // Predicated region
  $region2: #{tpu_custom_call.1} parent=0 // pred_check
    _
  $region3: #{tpu_custom_call.1} parent=0 // pred_check_branch
    %10 = sbr.rel (0) target = $region5
  $region4: #{tpu_custom_call.1} parent=0 // pred_region
    _
  $region5: #{tpu_custom_call.1} parent=0 // pred_fallthru
    _
  // Predicated region
  $region6: #{tpu_custom_call.1} parent=0 // pred_check
    _
  $region7: #{tpu_custom_call.1} parent=0 // pred_check_branch
    %12 = sbr.rel (0) target = $region9
  $region8: #{tpu_custom_call.1} parent=0 // pred_region
    _
  $region9: #{tpu_custom_call.1} parent=0 // pred_fallthru
    _
  // Predicated region
  $region10: #{tpu_custom_call.1} parent=0 // pred_check
    _
  $region11: #{tpu_custom_call.1} parent=0 // pred_check_branch
    %14 = sbr.rel (0) target = $region13
  $region12: #{tpu_custom_call.1} parent=0 // pred_region
    _
  $region13: #{tpu_custom_call.1} parent=0 // pred_fallthru
    _
  // Predicated region
  $region14: #{tpu_custom_call.1} parent=0 // pred_check
    _
  $region15: #{tpu_custom_call.1} parent=0 // pred_check_branch
    %16 = sbr.rel (0) target = $region17
  $region16: #{tpu_custom_call.1} parent=0 // pred_region
    _
  $region17: #{tpu_custom_call.1} parent=0 // pred_fallthru
    _
  %p18 = scmp.eq.s32.totalorder 0, 0
  // Predicated region
  $region18: #{tpu_custom_call.1} parent=0 // pred_check
    %p19 = pneg %p18
  $region19: #{tpu_custom_call.1} parent=0 // pred_check_branch
    %21 = sbr.rel (%p19) target = $region21
  $region20: #{tpu_custom_call.1} parent=0 // pred_region
    %vm22 = vcmask 523264
    %23 = vst.msk [vmem:[#allocation2] sm:$0xff] %vm22, 0.0
    %24 = vst.msk [vmem:[#allocation2 + $0x8] sm:$0xff] %vm22, 0.0
    %25 = vst.msk [vmem:[#allocation2 + $0x10] sm:$0xff] %vm22, 0.0
    %26 = vst.msk [vmem:[#allocation2 + $0x18] sm:$0xff] %vm22, 0.0
    %27 = vst.msk [vmem:[#allocation2 + $0x20] sm:$0xff] %vm22, 0.0
    %28 = vst.msk [vmem:[#allocation2 + $0x28] sm:$0xff] %vm22, 0.0
    %29 = vst.msk [vmem:[#allocation2 + $0x30] sm:$0xff] %vm22, 0.0
    %30 = vst.msk [vmem:[#allocation2 + $0x38] sm:$0xff] %vm22, 0.0
    %31 = vst.msk [vmem:[#allocation2 + $0x40] sm:$0xff] %vm22, 0.0
    %32 = vst.msk [vmem:[#allocation2 + $0x48] sm:$0xff] %vm22, 0.0
    %33 = vst.msk [vmem:[#allocation2 + $0x50] sm:$0xff] %vm22, 0.0
    %34 = vst.msk [vmem:[#allocation2 + $0x58] sm:$0xff] %vm22, 0.0
    %35 = vst.msk [vmem:[#allocation2 + $0x60] sm:$0xff] %vm22, 0.0
    %36 = vst.msk [vmem:[#allocation2 + $0x68] sm:$0xff] %vm22, 0.0
    %37 = vst.msk [vmem:[#allocation2 + $0x70] sm:$0xff] %vm22, 0.0
    %38 = vst.msk [vmem:[#allocation2 + $0x78] sm:$0xff] %vm22, 0.0
  $region21: #{tpu_custom_call.1} parent=0 // pred_fallthru
    _
  %v39 = vld [vmem:[#allocation2] sm:$0xff]
  %v40 = vld [vmem:[#allocation2 + $0x8] sm:$0xff]
  %v41 = vld [vmem:[#allocation2 + $0x10] sm:$0xff]
  %v42 = vld [vmem:[#allocation2 + $0x18] sm:$0xff]
  %v43 = vld [vmem:[#allocation2 + $0x20] sm:$0xff]
  %v44 = vld [vmem:[#allocation2 + $0x28] sm:$0xff]
  %v45 = vld [vmem:[#allocation2 + $0x30] sm:$0xff]
  %v46 = vld [vmem:[#allocation2 + $0x38] sm:$0xff]
  %v47 = vld [vmem:[#allocation2 + $0x40] sm:$0xff]
  %v48 = vld [vmem:[#allocation2 + $0x48] sm:$0xff]
  %v49 = vld [vmem:[#allocation2 + $0x50] sm:$0xff]
  %v50 = vld [vmem:[#allocation2 + $0x58] sm:$0xff]
  %v51 = vld [vmem:[#allocation2 + $0x60] sm:$0xff]
  %v52 = vld [vmem:[#allocation2 + $0x68] sm:$0xff]
  %v53 = vld [vmem:[#allocation2 + $0x70] sm:$0xff]
  %v54 = vld [vmem:[#allocation2 + $0x78] sm:$0xff]
  %v55 = vld [vmem:[%s0] sm:$0xff]
  %v56 = vld [vmem:[%s0 + $0x8] sm:$0xff]
  %v57 = vld [vmem:[%s0 + $0x10] sm:$0xff]
  %v58 = vld [vmem:[%s0 + $0x18] sm:$0xff]
  %v59 = vld [vmem:[%s0 + $0x20] sm:$0xff]
  %v60 = vld [vmem:[%s0 + $0x28] sm:$0xff]
  %v61 = vld [vmem:[%s0 + $0x30] sm:$0xff]
  %v62 = vld [vmem:[%s0 + $0x38] sm:$0xff]
  %v63 = vld [vmem:[%s0 + $0x40] sm:$0xff]
  %v64 = vld [vmem:[%s0 + $0x48] sm:$0xff]
  %v65 = vld [vmem:[%s0 + $0x50] sm:$0xff]
  %v66 = vld [vmem:[%s0 + $0x58] sm:$0xff]
  %v67 = vld [vmem:[%s0 + $0x60] sm:$0xff]
  %v68 = vld [vmem:[%s0 + $0x68] sm:$0xff]
  %v69 = vld [vmem:[%s0 + $0x70] sm:$0xff]
  %v70 = vld [vmem:[%s0 + $0x78] sm:$0xff]
  %v71 = vld [vmem:[%s1] sm:$0xf]
  %v72 = vld [vmem:[%s1 + $0x4] sm:$0xf]
  %v73 = vld [vmem:[%s1 + $0x8] sm:$0xf]
  %v74 = vld [vmem:[%s1 + $0xc] sm:$0xf]
  %v75 = vld [vmem:[%s1 + $0x10] sm:$0xf]
  %v76 = vld [vmem:[%s1 + $0x14] sm:$0xf]
  %v77 = vld [vmem:[%s1 + $0x18] sm:$0xf]
  %v78 = vld [vmem:[%s1 + $0x1c] sm:$0xf]
  %v79 = vld [vmem:[%s1 + $0x20] sm:$0xf]
  %v80 = vld [vmem:[%s1 + $0x24] sm:$0xf]
  %v81 = vld [vmem:[%s1 + $0x28] sm:$0xf]
  %v82 = vld [vmem:[%s1 + $0x2c] sm:$0xf]
  %v83 = vld [vmem:[%s1 + $0x30] sm:$0xf]
  %v84 = vld [vmem:[%s1 + $0x34] sm:$0xf]
  %v85 = vld [vmem:[%s1 + $0x38] sm:$0xf]
  %v86 = vld [vmem:[%s1 + $0x3c] sm:$0xf]
  %v87 = vld [vmem:[%s1 + $0x40] sm:$0xf]
  %v88 = vld [vmem:[%s1 + $0x44] sm:$0xf]
  %v89 = vld [vmem:[%s1 + $0x48] sm:$0x3]
  %v106 = vunpack.c.l.b16 %v55
  %v107 = vunpack.c.h.b16 %v55
  %v108 = vunpack.c.l.b16 %v56
  %v109 = vunpack.c.h.b16 %v56
  %v110 = vunpack.c.l.b16 %v57
  %v111 = vunpack.c.h.b16 %v57
  %v112 = vunpack.c.l.b16 %v58
  %v113 = vunpack.c.h.b16 %v58
  %v114 = vunpack.c.l.b16 %v59
  %v115 = vunpack.c.h.b16 %v59
  %v116 = vunpack.c.l.b16 %v60
  %v117 = vunpack.c.h.b16 %v60
  %v118 = vunpack.c.l.b16 %v61
  %v119 = vunpack.c.h.b16 %v61
  %v120 = vunpack.c.l.b16 %v62
  %v121 = vunpack.c.h.b16 %v62
  %v122 = vunpack.c.l.b16 %v63
  %v123 = vunpack.c.h.b16 %v63
  %v124 = vunpack.c.l.b16 %v64
  %v125 = vunpack.c.h.b16 %v64
  %v126 = vunpack.c.l.b16 %v65
  %v127 = vunpack.c.h.b16 %v65
  %v128 = vunpack.c.l.b16 %v66
  %v129 = vunpack.c.h.b16 %v66
  %v130 = vunpack.c.l.b16 %v67
  %v131 = vunpack.c.h.b16 %v67
  %v132 = vunpack.c.l.b16 %v68
  %v133 = vunpack.c.h.b16 %v68
  %v134 = vunpack.c.l.b16 %v69
  %v135 = vunpack.c.h.b16 %v69
  %v136 = vunpack.c.l.b16 %v70
  %v137 = vunpack.c.h.b16 %v70
  %v138 = vpack.c.b16 %v108, %v106
  %v139 = vpack.c.b16 %v109, %v107
  %v140 = vpack.c.b16 %v112, %v110
  %v141 = vpack.c.b16 %v113, %v111
  %v142 = vpack.c.b16 %v116, %v114
  %v143 = vpack.c.b16 %v117, %v115
  %v144 = vpack.c.b16 %v120, %v118
  %v145 = vpack.c.b16 %v121, %v119
  %v146 = vpack.c.b16 %v124, %v122
  %v147 = vpack.c.b16 %v125, %v123
  %v148 = vpack.c.b16 %v128, %v126
  %v149 = vpack.c.b16 %v129, %v127
  %v150 = vpack.c.b16 %v132, %v130
  %v151 = vpack.c.b16 %v133, %v131
  %v152 = vpack.c.b16 %v136, %v134
  %v153 = vpack.c.b16 %v137, %v135
  %v181 = vunpack.c.l.b16 %v71
  %v182 = vunpack.c.l.b16 %v72
  %v183 = vunpack.c.l.b16 %v73
  %v184 = vunpack.c.l.b16 %v74
  %v185 = vunpack.c.l.b16 %v75
  %v186 = vunpack.c.l.b16 %v76
  %v187 = vunpack.c.l.b16 %v77
  %v188 = vunpack.c.l.b16 %v78
  %v189 = vunpack.c.l.b16 %v79
  %v190 = vunpack.c.l.b16 %v80
  %v191 = vunpack.c.l.b16 %v81
  %v192 = vunpack.c.l.b16 %v82
  %v193 = vunpack.c.l.b16 %v83
  %v194 = vunpack.c.l.b16 %v84
  %v195 = vunpack.c.l.b16 %v85
  %v196 = vunpack.c.l.b16 %v86
  %v197 = vunpack.c.l.b16 %v87
  %v198 = vunpack.c.l.b16 %v88
  %v199 = vunpack.c.l.b16 %v89
  %v200 = vpack.c.b16 %v182, %v181
  %v201 = vpack.c.b16 %v184, %v183
  %v202 = vpack.c.b16 %v186, %v185
  %v203 = vpack.c.b16 %v188, %v187
  %v204 = vpack.c.b16 %v190, %v189
  %v205 = vpack.c.b16 %v192, %v191
  %v206 = vpack.c.b16 %v194, %v193
  %v207 = vpack.c.b16 %v196, %v195
  %v208 = vpack.c.b16 %v198, %v197
  %v209 = vpack.c.b16 %v199, %v199
  %vm219 = vcmask 154624
  %v221 = vsel %vm219, %v139, 0
  %v224 = vsel %vm219, %v141, 0
  %v227 = vsel %vm219, %v143, 0
  %v230 = vsel %vm219, %v145, 0
  %v233 = vsel %vm219, %v147, 0
  %v236 = vsel %vm219, %v149, 0
  %v239 = vsel %vm219, %v151, 0
  %v242 = vsel %vm219, %v153, 0
  %vm244 = vcmask 1040384
  %vm245 = vcmask 1041408
  %v246 = vsel %vm244, 4294967295, 65535
  %v247 = vsel %vm245, %v246, 0
  %v249 = vand.u32 %v209, %v247
  %251 = vmatprep.subr.bf16.mxu0 0
  %252 = vmatpush1.bf16.msra.mxu0 %v200
  %253 = vmatprep.subr.bf16.mxu0 0
  %254 = vmatpush1.bf16.msra.mxu0 %v201
  %255 = vmatprep.subr.bf16.mxu0 0
  %256 = vmatpush1.bf16.msra.mxu0 %v202
  %257 = vmatprep.subr.bf16.mxu0 0
  %258 = vmatpush1.bf16.msra.mxu0 %v203
  %259 = vmatprep.subr.bf16.mxu0 0
  %260 = vmatpush1.bf16.msra.mxu0 %v204
  %261 = vmatprep.subr.bf16.mxu0 0
  %262 = vmatpush1.bf16.msra.mxu0 %v205
  %263 = vmatprep.subr.bf16.mxu0 0
  %264 = vmatpush1.bf16.msra.mxu0 %v206
  %265 = vmatprep.subr.bf16.mxu0 0
  %266 = vmatpush1.bf16.msra.mxu0 %v207
  %267 = vmatprep.subr.bf16.mxu0 0
  %268 = vmatpush1.bf16.msra.mxu0 %v208
  %269 = vmatprep.subr.bf16.mxu0 0
  %270 = vmatpush1.bf16.msra.mxu0 %v249
  %271 = vmatprep.subr.bf16.mxu0 0
  %272 = vmatpush1.bf16.msra.mxu0 0
  %273 = vmatprep.subr.bf16.mxu0 0
  %274 = vmatpush1.bf16.msra.mxu0 0
  %275 = vmatprep.subr.bf16.mxu0 0
  %276 = vmatpush1.bf16.msra.mxu0 0
  %277 = vmatprep.subr.bf16.mxu0 0
  %278 = vmatpush1.bf16.msra.mxu0 0
  %279 = vmatprep.subr.bf16.mxu0 0
  %280 = vmatpush1.bf16.msra.mxu0 0
  %281 = vmatprep.subr.bf16.mxu0 0
  %282 = vmatpush1.bf16.msra.mxu0 0
  %283 = vmatprep.mubr.bf16.mxu0 %v221
  %284 = vmatmul.mubr.bf16.gmra.mrb[0].mxu0 %v138
  %v285 = vpop.f32.mrb[0].mxu0
  %v286 = vadd.f32 0.0, %v285
  %v287 = vpop.f32.mrb[0].mxu0
  %v288 = vpop.f32.mrb[0].mxu0
  %v289 = vadd.f32 0.0, %v288
  %v290 = vpop.f32.mrb[0].mxu0
  %291 = vmatprep.mubr.bf16.mxu0 %v224
  %292 = vmatmul.mubr.bf16.gmra.mrb[0].mxu0 %v140
  %v293 = vpop.f32.mrb[0].mxu0
  %v294 = vadd.f32 0.0, %v293
  %v295 = vpop.f32.mrb[0].mxu0
  %v296 = vpop.f32.mrb[0].mxu0
  %v297 = vadd.f32 0.0, %v296
  %v298 = vpop.f32.mrb[0].mxu0
  %299 = vmatprep.mubr.bf16.mxu0 %v227
  %300 = vmatmul.mubr.bf16.gmra.mrb[0].mxu0 %v142
  %v301 = vpop.f32.mrb[0].mxu0
  %v302 = vadd.f32 0.0, %v301
  %v303 = vpop.f32.mrb[0].mxu0
  %v304 = vpop.f32.mrb[0].mxu0
  %v305 = vadd.f32 0.0, %v304
  %v306 = vpop.f32.mrb[0].mxu0
  %307 = vmatprep.mubr.bf16.mxu0 %v230
  %308 = vmatmul.mubr.bf16.gmra.mrb[0].mxu0 %v144
  %v309 = vpop.f32.mrb[0].mxu0
  %v310 = vadd.f32 0.0, %v309
  %v311 = vpop.f32.mrb[0].mxu0
  %v312 = vpop.f32.mrb[0].mxu0
  %v313 = vadd.f32 0.0, %v312
  %v314 = vpop.f32.mrb[0].mxu0
  %315 = vmatprep.mubr.bf16.mxu0 %v233
  %316 = vmatmul.mubr.bf16.gmra.mrb[0].mxu0 %v146
  %v317 = vpop.f32.mrb[0].mxu0
  %v318 = vadd.f32 0.0, %v317
  %v319 = vpop.f32.mrb[0].mxu0
  %v320 = vpop.f32.mrb[0].mxu0
  %v321 = vadd.f32 0.0, %v320
  %v322 = vpop.f32.mrb[0].mxu0
  %323 = vmatprep.mubr.bf16.mxu0 %v236
  %324 = vmatmul.mubr.bf16.gmra.mrb[0].mxu0 %v148
  %v325 = vpop.f32.mrb[0].mxu0
  %v326 = vadd.f32 0.0, %v325
  %v327 = vpop.f32.mrb[0].mxu0
  %v328 = vpop.f32.mrb[0].mxu0
  %v329 = vadd.f32 0.0, %v328
  %v330 = vpop.f32.mrb[0].mxu0
  %331 = vmatprep.mubr.bf16.mxu0 %v239
  %332 = vmatmul.mubr.bf16.gmra.mrb[0].mxu0 %v150
  %v333 = vpop.f32.mrb[0].mxu0
  %v334 = vadd.f32 0.0, %v333
  %v335 = vpop.f32.mrb[0].mxu0
  %v336 = vpop.f32.mrb[0].mxu0
  %v337 = vadd.f32 0.0, %v336
  %v338 = vpop.f32.mrb[0].mxu0
  %339 = vmatprep.mubr.bf16.mxu0 %v242
  %340 = vmatmul.mubr.bf16.gmra.mrb[0].mxu0 %v152
  %v341 = vpop.f32.mrb[0].mxu0
  %v342 = vadd.f32 0.0, %v341
  %v343 = vpop.f32.mrb[0].mxu0
  %v344 = vpop.f32.mrb[0].mxu0
  %v345 = vadd.f32 0.0, %v344
  %v346 = vpop.f32.mrb[0].mxu0
  %347 = vdwg.mxu0
  %v348 = vadd.f32 %v39, %v286
  %v349 = vadd.f32 %v40, %v289
  %v350 = vadd.f32 %v41, %v294
  %v351 = vadd.f32 %v42, %v297
  %v352 = vadd.f32 %v43, %v302
  %v353 = vadd.f32 %v44, %v305
  %v354 = vadd.f32 %v45, %v310
  %v355 = vadd.f32 %v46, %v313
  %v356 = vadd.f32 %v47, %v318
  %v357 = vadd.f32 %v48, %v321
  %v358 = vadd.f32 %v49, %v326
  %v359 = vadd.f32 %v50, %v329
  %v360 = vadd.f32 %v51, %v334
  %v361 = vadd.f32 %v52, %v337
  %v362 = vadd.f32 %v53, %v342
  %v363 = vadd.f32 %v54, %v345
  %vm364 = vcmask 523264
  %365 = vst.msk [vmem:[#allocation2] sm:$0xff] %vm364, %v348
  %366 = vst.msk [vmem:[#allocation2 + $0x8] sm:$0xff] %vm364, %v349
  %367 = vst.msk [vmem:[#allocation2 + $0x10] sm:$0xff] %vm364, %v350
  %368 = vst.msk [vmem:[#allocation2 + $0x18] sm:$0xff] %vm364, %v351
  %369 = vst.msk [vmem:[#allocation2 + $0x20] sm:$0xff] %vm364, %v352
  %370 = vst.msk [vmem:[#allocation2 + $0x28] sm:$0xff] %vm364, %v353
  %371 = vst.msk [vmem:[#allocation2 + $0x30] sm:$0xff] %vm364, %v354
  %372 = vst.msk [vmem:[#allocation2 + $0x38] sm:$0xff] %vm364, %v355
  %373 = vst.msk [vmem:[#allocation2 + $0x40] sm:$0xff] %vm364, %v356
  %374 = vst.msk [vmem:[#allocation2 + $0x48] sm:$0xff] %vm364, %v357
  %375 = vst.msk [vmem:[#allocation2 + $0x50] sm:$0xff] %vm364, %v358
  %376 = vst.msk [vmem:[#allocation2 + $0x58] sm:$0xff] %vm364, %v359
  %377 = vst.msk [vmem:[#allocation2 + $0x60] sm:$0xff] %vm364, %v360
  %378 = vst.msk [vmem:[#allocation2 + $0x68] sm:$0xff] %vm364, %v361
  %379 = vst.msk [vmem:[#allocation2 + $0x70] sm:$0xff] %vm364, %v362
  %380 = vst.msk [vmem:[#allocation2 + $0x78] sm:$0xff] %vm364, %v363
  // Predicated region
  $region22: #{tpu_custom_call.1} parent=0 // pred_check
    %p381 = pneg %p18
  $region23: #{tpu_custom_call.1} parent=0 // pred_check_branch
    %383 = sbr.rel (%p381) target = $region25
  $region24: #{tpu_custom_call.1} parent=0 // pred_region
    %v384 = vld [vmem:[#allocation2] sm:$0xff]
    %v385 = vld [vmem:[#allocation2 + $0x8] sm:$0xff]
    %v386 = vld [vmem:[#allocation2 + $0x10] sm:$0xff]
    %v387 = vld [vmem:[#allocation2 + $0x18] sm:$0xff]
    %v388 = vld [vmem:[#allocation2 + $0x20] sm:$0xff]
    %v389 = vld [vmem:[#allocation2 + $0x28] sm:$0xff]
    %v390 = vld [vmem:[#allocation2 + $0x30] sm:$0xff]
    %v391 = vld [vmem:[#allocation2 + $0x38] sm:$0xff]
    %v392 = vld [vmem:[#allocation2 + $0x40] sm:$0xff]
    %v393 = vld [vmem:[#allocation2 + $0x48] sm:$0xff]
    %v394 = vld [vmem:[#allocation2 + $0x50] sm:$0xff]
    %v395 = vld [vmem:[#allocation2 + $0x58] sm:$0xff]
    %v396 = vld [vmem:[#allocation2 + $0x60] sm:$0xff]
    %v397 = vld [vmem:[#allocation2 + $0x68] sm:$0xff]
    %v398 = vld [vmem:[#allocation2 + $0x70] sm:$0xff]
    %v399 = vld [vmem:[#allocation2 + $0x78] sm:$0xff]
    %v400 = vld [vmem:[%s2] sm:$0x1]
    %v402 = vlaneseq
    %v403 = vshrl.u32 %v402, 7
    %v404 = vsub.s32 0, %v403
    %v405 = vrot.slane %v400, %v404
    %v407 = vmul.f32 %v384, %v405
    %v408 = vmul.f32 %v385, %v405
    %v409 = vmul.f32 %v386, %v405
    %v410 = vmul.f32 %v387, %v405
    %v411 = vmul.f32 %v388, %v405
    %v412 = vmul.f32 %v389, %v405
    %v413 = vmul.f32 %v390, %v405
    %v414 = vmul.f32 %v391, %v405
    %v415 = vmul.f32 %v392, %v405
    %v416 = vmul.f32 %v393, %v405
    %v417 = vmul.f32 %v394, %v405
    %v418 = vmul.f32 %v395, %v405
    %v419 = vmul.f32 %v396, %v405
    %v420 = vmul.f32 %v397, %v405
    %v421 = vmul.f32 %v398, %v405
    %v422 = vmul.f32 %v399, %v405
    %v423 = vld [vmem:[%s3] sm:$0x1]
    %v425 = vlaneseq
    %v426 = vshrl.u32 %v425, 7
    %v427 = vsub.s32 0, %v426
    %v428 = vrot.slane %v423, %v427
    %v430 = vadd.f32 %v407, %v428
    %v431 = vadd.f32 %v408, %v428
    %v432 = vadd.f32 %v409, %v428
    %v433 = vadd.f32 %v410, %v428
    %v434 = vadd.f32 %v411, %v428
    %v435 = vadd.f32 %v412, %v428
    %v436 = vadd.f32 %v413, %v428
    %v437 = vadd.f32 %v414, %v428
    %v438 = vadd.f32 %v415, %v428
    %v439 = vadd.f32 %v416, %v428
    %v440 = vadd.f32 %v417, %v428
    %v441 = vadd.f32 %v418, %v428
    %v442 = vadd.f32 %v419, %v428
    %v443 = vadd.f32 %v420, %v428
    %v444 = vadd.f32 %v421, %v428
    %v445 = vadd.f32 %v422, %v428
    %v446 = vmax.f32 %v430, 0.0
    %v447 = vmax.f32 %v431, 0.0
    %v448 = vmax.f32 %v432, 0.0
    %v449 = vmax.f32 %v433, 0.0
    %v450 = vmax.f32 %v434, 0.0
    %v451 = vmax.f32 %v435, 0.0
    %v452 = vmax.f32 %v436, 0.0
    %v453 = vmax.f32 %v437, 0.0
    %v454 = vmax.f32 %v438, 0.0
    %v455 = vmax.f32 %v439, 0.0
    %v456 = vmax.f32 %v440, 0.0
    %v457 = vmax.f32 %v441, 0.0
    %v458 = vmax.f32 %v442, 0.0
    %v459 = vmax.f32 %v443, 0.0
    %v460 = vmax.f32 %v444, 0.0
    %v461 = vmax.f32 %v445, 0.0
    %v462 = vpack.c.bf16 %v447, %v446
    %v463 = vpack.c.bf16 %v449, %v448
    %v464 = vpack.c.bf16 %v451, %v450
    %v465 = vpack.c.bf16 %v453, %v452
    %v466 = vpack.c.bf16 %v455, %v454
    %v467 = vpack.c.bf16 %v457, %v456
    %v468 = vpack.c.bf16 %v459, %v458
    %v469 = vpack.c.bf16 %v461, %v460
    %v478 = vunpack.c.l.b16 %v462
    %v479 = vunpack.c.h.b16 %v462
    %v480 = vunpack.c.l.b16 %v463
    %v481 = vunpack.c.h.b16 %v463
    %v482 = vunpack.c.l.b16 %v464
    %v483 = vunpack.c.h.b16 %v464
    %v484 = vunpack.c.l.b16 %v465
    %v485 = vunpack.c.h.b16 %v465
    %v486 = vunpack.c.l.b16 %v466
    %v487 = vunpack.c.h.b16 %v466
    %v488 = vunpack.c.l.b16 %v467
    %v489 = vunpack.c.h.b16 %v467
    %v490 = vunpack.c.l.b16 %v468
    %v491 = vunpack.c.h.b16 %v468
    %v492 = vunpack.c.l.b16 %v469
    %v493 = vunpack.c.h.b16 %v469
    %v494 = vpack.c.b16 %v478, %v478
    %v495 = vpack.c.b16 %v479, %v479
    %v496 = vpack.c.b16 %v480, %v480
    %v497 = vpack.c.b16 %v481, %v481
    %v498 = vpack.c.b16 %v482, %v482
    %v499 = vpack.c.b16 %v483, %v483
    %v500 = vpack.c.b16 %v484, %v484
    %v501 = vpack.c.b16 %v485, %v485
    %v502 = vpack.c.b16 %v486, %v486
    %v503 = vpack.c.b16 %v487, %v487
    %v504 = vpack.c.b16 %v488, %v488
    %v505 = vpack.c.b16 %v489, %v489
    %v506 = vpack.c.b16 %v490, %v490
    %v507 = vpack.c.b16 %v491, %v491
    %v508 = vpack.c.b16 %v492, %v492
    %v509 = vpack.c.b16 %v493, %v493
    %vm526 = vcmask 519168
    %527 = vst.msk [vmem:[%s4] sm:$0xf] %vm526, %v494
    %528 = vst.msk [vmem:[%s4 + $0x4] sm:$0xf] %vm526, %v495
    %529 = vst.msk [vmem:[%s4 + $0x8] sm:$0xf] %vm526, %v496
    %530 = vst.msk [vmem:[%s4 + $0xc] sm:$0xf] %vm526, %v497
    %531 = vst.msk [vmem:[%s4 + $0x10] sm:$0xf] %vm526, %v498
    %532 = vst.msk [vmem:[%s4 + $0x14] sm:$0xf] %vm526, %v499
    %533 = vst.msk [vmem:[%s4 + $0x18] sm:$0xf] %vm526, %v500
    %534 = vst.msk [vmem:[%s4 + $0x1c] sm:$0xf] %vm526, %v501
    %535 = vst.msk [vmem:[%s4 + $0x20] sm:$0xf] %vm526, %v502
    %536 = vst.msk [vmem:[%s4 + $0x24] sm:$0xf] %vm526, %v503
    %537 = vst.msk [vmem:[%s4 + $0x28] sm:$0xf] %vm526, %v504
    %538 = vst.msk [vmem:[%s4 + $0x2c] sm:$0xf] %vm526, %v505
    %539 = vst.msk [vmem:[%s4 + $0x30] sm:$0xf] %vm526, %v506
    %540 = vst.msk [vmem:[%s4 + $0x34] sm:$0xf] %vm526, %v507
    %541 = vst.msk [vmem:[%s4 + $0x38] sm:$0xf] %vm526, %v508
    %542 = vst.msk [vmem:[%s4 + $0x3c] sm:$0xf] %vm526, %v509
  $region25: #{tpu_custom_call.1} parent=0 // pred_fallthru
    _
  // Predicated region
  $region26: #{tpu_custom_call.1} parent=0 // pred_check
    _
  $region27: #{tpu_custom_call.1} parent=0 // pred_check_branch
    %544 = sbr.rel (0) target = $region29
  $region28: #{tpu_custom_call.1} parent=0 // pred_region
    _
  $region29: #{tpu_custom_call.1} parent=0 // pred_fallthru
    _
  // Predicated region
  $region30: #{tpu_custom_call.1} parent=0 // pred_check
    _
  $region31: #{tpu_custom_call.1} parent=0 // pred_check_branch
    %546 = sbr.rel (0) target = $region33
  $region32: #{tpu_custom_call.1} parent=0 // pred_region
    _
  $region33: #{tpu_custom_call.1} parent=0 // pred_fallthru
    _

</llo_original>
